<compile_context>
chip_gen: v6e
topology: v6e:2x2x1
jax: 0.10.0
libtpu: 0.0.40
codegen_flags: <defaults>
</compile_context>

<pallas_src>
import math

import jax
import jax.numpy as jnp
from jax.experimental import pallas as pl
from jax.experimental.pallas import tpu as pltpu


# --------------------------------------------------------------------------- #
# Kernel
# --------------------------------------------------------------------------- #
def _make_fused_kernel(input_dim, action_dim):
    """Kernel factory. refs = [obs, act, w0, b0, (w_i, b_i)..., out, cat_scr]."""

    def kernel(*refs):
        obs_ref, act_ref, w0_ref, b0_ref = refs[:4]
        out_ref, cat_scr = refs[-2], refs[-1]
        rest = refs[4:-2]

        # In-kernel concat(obs, act): two cheap VMEM stores (NOT an HBM concat).
        cat_scr[:, :input_dim] = obs_ref[...]
        cat_scr[:, input_dim:] = act_ref[...]

        # Layer 0: one K = concat_dim matmul over the fused (obs|act) tile,
        # f32 accumulation on the MXU, bias-add / ReLU in f32 on the VPU.
        h = (
            jnp.dot(cat_scr[...], w0_ref[...], preferred_element_type=jnp.float32)
            + b0_ref[...]
        )
        h = jnp.maximum(h, 0.0)  # nn.ReLU()

        n_rest = len(rest) // 2
        for i in range(n_rest):
            w_ref, b_ref = rest[2 * i], rest[2 * i + 1]
            h = (
                jnp.dot(h, w_ref[...], preferred_element_type=jnp.float32)
                + b_ref[...]
            )
            if i < n_rest - 1:  # no ReLU after the final (output) layer
                h = jnp.maximum(h, 0.0)

        # (tb, 2) result: q1 = column 0, q2 = column 1.
        # TODO(synk): if per-step writeback ever shows in a profile, emit the
        # output lane-dense as (2, B) via an XLU transpose (tiny win at best).
        out_ref[...] = h.astype(out_ref.dtype)

    return kernel


# --------------------------------------------------------------------------- #
# Parameter init / prepacking (done once, outside the hot path)
# --------------------------------------------------------------------------- #
def init_critic_params(key, concat_dim, hidden_dims, output_dim=1):
    """nn.Linear-default-style init (uniform +-1/sqrt(fan_in)), f32."""
    dims = [concat_dim] + list(hidden_dims) + [output_dim]
    params = []
    for i in range(len(dims) - 1):
        key, kw, kb = jax.random.split(key, 3)
        bound = 1.0 / math.sqrt(dims[i])
        w = jax.random.uniform(kw, (dims[i], dims[i + 1]), jnp.float32, -bound, bound)
        b = jax.random.uniform(kb, (1, dims[i + 1]), jnp.float32, -bound, bound)
        params.append((w, b))
    return params


def pack_double_critic_params(params1, params2, weight_dtype=jnp.float32):
    """Fuse the two critics into ONE weight set (call once at init)."""
    assert len(params1) == len(params2)
    w1_0, b1_0 = params1[0]
    w2_0, b2_0 = params2[0]
    # Layer 0: horizontal concat of the two critics' first layers.
    w0 = jnp.concatenate([w1_0, w2_0], axis=1).astype(weight_dtype)
    b0 = jnp.concatenate([b1_0, b2_0], axis=1).astype(jnp.float32)

    rest = []
    for i in range(1, len(params1)):
        w1, b1 = params1[i]
        w2, b2 = params2[i]
        di1, do1 = w1.shape
        di2, do2 = w2.shape
        w = jnp.zeros((di1 + di2, do1 + do2), jnp.float32)
        w = w.at[:di1, :do1].set(w1).at[di1:, do1:].set(w2)  # block-diagonal
        b = jnp.concatenate([b1, b2], axis=1).astype(jnp.float32)
        rest.append((w.astype(weight_dtype), b))

    return (w0, b0), tuple(rest)


# --------------------------------------------------------------------------- #
# Wrapper
# --------------------------------------------------------------------------- #
def _round_up(x, m):
    return ((x + m - 1) // m) * m


def _choose_tile_b(batch, max_tile_b):
    """Pick the batch tile.

    * Tiny batches: one tile (v5e/v6e grid is a serial loop; extra steps are
      pure per-step overhead).
    * Otherwise: guarantee >=2 grid steps so v7x's 2 TensorCores both get work
      on the "parallel" batch axis, capped at max_tile_b so very large batches
      still end up with only a handful of steps (VMEM is never the limit here).
    """
    tb = _round_up(batch, 8)
    if tb <= 16:
        return tb
    return max(8, min(max_tile_b, _round_up(pl.cdiv(batch, 2), 8)))


def double_critic_forward(observations, actions, packed_params, max_tile_b=8192):
    """Fused DoubleCritic forward. Returns (q1, q2), each of shape [B]."""
    (w0, b0), rest = packed_params
    B, input_dim = observations.shape
    action_dim = actions.shape[-1]
    concat_dim = input_dim + action_dim
    assert w0.shape[0] == concat_dim

    # No wrapper-side cast (kernel consumes f32 directly) and no wrapper pad
    # (cdiv grid handles the partial last block).
    if observations.dtype != jnp.float32:
        observations = observations.astype(jnp.float32)
    if actions.dtype != jnp.float32:
        actions = actions.astype(jnp.float32)

    tb = _choose_tile_b(B, max_tile_b)
    grid = (pl.cdiv(B, tb),)

    def resident(arr):
        # Full-array block with a constant index_map -> stays VMEM-resident,
        # no per-step re-DMA of the weights/biases.
        # TODO(synk): add pipeline_mode=pl.Buffered(1) (single-buffer hygiene)
        # once confirmed supported on the deployed jax version.
        return pl.BlockSpec(arr.shape, lambda i: (0, 0))

    flat_params = [w0, b0]
    param_specs = [resident(w0), resident(b0)]
    for (w, b) in rest:
        flat_params += [w, b]
        param_specs += [resident(w), resident(b)]

    grid_spec = pltpu.PrefetchScalarGridSpec(
        num_scalar_prefetch=0,
        grid=grid,
        in_specs=[
            pl.BlockSpec((tb, input_dim), lambda i: (i, 0)),
            pl.BlockSpec((tb, action_dim), lambda i: (i, 0)),
            *param_specs,
        ],
        out_specs=pl.BlockSpec((tb, 2), lambda i: (i, 0)),
        scratch_shapes=[pltpu.VMEM((tb, concat_dim), jnp.float32)],
    )

    out = pl.pallas_call(
        _make_fused_kernel(input_dim, action_dim),
        grid_spec=grid_spec,
        out_shape=jax.ShapeDtypeStruct((B, 2), jnp.float32),
        compiler_params=pltpu.CompilerParams(
            dimension_semantics=("parallel",),   # v7x: shard batch tiles over 2 TCs
            vmem_limit_bytes=32 * 1024 * 1024,   # plenty; working set is < 1 MiB
        ),
    )(observations, actions, *flat_params)

    # critic.squeeze(-1) for each critic.
    return out[:, 0], out[:, 1]


# --------------------------------------------------------------------------- #
# Pure-JAX reference of the PyTorch module
# --------------------------------------------------------------------------- #
def reference_forward(observations, actions, params1, params2):
    x = jnp.concatenate([observations, actions], axis=-1).astype(jnp.float32)

    def mlp(h, params):
        for i, (w, b) in enumerate(params):
            h = jnp.dot(h, w, precision=jax.lax.Precision.HIGHEST) + b
            if i < len(params) - 1:
                h = jnp.maximum(h, 0.0)
        return h[:, 0]

    return mlp(x, params1), mlp(x, params2)


# --------------------------------------------------------------------------- #
# Test
# --------------------------------------------------------------------------- #
if __name__ == "__main__":
    input_dim, action_dim = 16, 8
    hidden_dims = (32, 32)
    concat_dim = input_dim + action_dim

    root = jax.random.PRNGKey(0)
    k_p1, k_p2, k_obs, k_act, k_obs2, k_act2 = jax.random.split(root, 6)

    params1 = init_critic_params(k_p1, concat_dim, hidden_dims)
    params2 = init_critic_params(k_p2, concat_dim, hidden_dims)
    packed = pack_double_critic_params(params1, params2)   # prepack ONCE

    # Case 1: small batch, single tile.
    batch = 8
    observations = jax.random.normal(k_obs, (batch, input_dim), jnp.float32)
    actions = jax.random.normal(k_act, (batch, action_dim), jnp.float32)

    q1, q2 = double_critic_forward(observations, actions, packed)
    q1 = jax.block_until_ready(q1)
    q2 = jax.block_until_ready(q2)

    r1, r2 = reference_forward(observations, actions, params1, params2)
    assert q1.shape == (batch,) and q2.shape == (batch,)
    assert jnp.allclose(q1, r1, atol=1e-2, rtol=1e-2), (q1, r1)
    assert jnp.allclose(q2, r2, atol=1e-2, rtol=1e-2), (q2, r2)

    # Case 2: batch not a tile multiple -> exercises the cdiv grid / partial
    # last block path (no wrapper-side padding) and the multi-step pipeline.
    batch2 = 50
    obs2 = jax.random.normal(k_obs2, (batch2, input_dim), jnp.float32)
    act2 = jax.random.normal(k_act2, (batch2, action_dim), jnp.float32)

    q1b, q2b = double_critic_forward(obs2, act2, packed)
    q1b = jax.block_until_ready(q1b)
    q2b = jax.block_until_ready(q2b)

    r1b, r2b = reference_forward(obs2, act2, params1, params2)
    assert q1b.shape == (batch2,) and q2b.shape == (batch2,)
    assert jnp.allclose(q1b, r1b, atol=1e-2, rtol=1e-2), (q1b, r1b)
    assert jnp.allclose(q2b, r2b, atol=1e-2, rtol=1e-2), (q2b, r2b)

    print("KERNEL_OK")
</pallas_src>

<mosaic_0001>
module attributes {stable_mosaic.version = 11 : i64} {
  func.func @kernel(%arg0: i32, %arg1: memref<8x16xf32, #tpu.memory_space<vmem>>, %arg2: memref<8x8xf32, #tpu.memory_space<vmem>>, %arg3: memref<24x64xf32, #tpu.memory_space<vmem>>, %arg4: memref<1x64xf32, #tpu.memory_space<vmem>>, %arg5: memref<64x64xf32, #tpu.memory_space<vmem>>, %arg6: memref<1x64xf32, #tpu.memory_space<vmem>>, %arg7: memref<64x2xf32, #tpu.memory_space<vmem>>, %arg8: memref<1x2xf32, #tpu.memory_space<vmem>>, %arg9: memref<8x2xf32, #tpu.memory_space<vmem>>, %arg10: memref<8x24xf32, #tpu.memory_space<vmem>>) attributes {dimension_semantics = [#tpu.dimension_semantics<parallel>], iteration_bounds = array<i64: 1>, scalar_prefetch = 0 : i64, scratch_operands = 1 : i64, tpu.core_type = #tpu.core_type<tc>, window_params = [{transform_indices = @transform_0, window_bounds = array<i64: 8, 16>}, {transform_indices = @transform_1, window_bounds = array<i64: 8, 8>}, {pipeline_mode = #tpu.pipeline_mode<synchronous>, transform_indices = @transform_2, window_bounds = array<i64: 24, 64>}, {pipeline_mode = #tpu.pipeline_mode<synchronous>, transform_indices = @transform_3, window_bounds = array<i64: 1, 64>}, {pipeline_mode = #tpu.pipeline_mode<synchronous>, transform_indices = @transform_4, window_bounds = array<i64: 64, 64>}, {pipeline_mode = #tpu.pipeline_mode<synchronous>, transform_indices = @transform_5, window_bounds = array<i64: 1, 64>}, {pipeline_mode = #tpu.pipeline_mode<synchronous>, transform_indices = @transform_6, window_bounds = array<i64: 64, 2>}, {pipeline_mode = #tpu.pipeline_mode<synchronous>, transform_indices = @transform_7, window_bounds = array<i64: 1, 2>}, {transform_indices = @transform_8, window_bounds = array<i64: 8, 2>}]} {
    %c0 = arith.constant 0 : index
    %c0_0 = arith.constant 0 : index
    %0 = vector.load %arg1[%c0, %c0_0] : memref<8x16xf32, #tpu.memory_space<vmem>>, vector<8x16xf32>
    %c0_1 = arith.constant 0 : index
    %c0_2 = arith.constant 0 : index
    %1 = vector.load %arg10[%c0_1, %c0_2] : memref<8x24xf32, #tpu.memory_space<vmem>>, vector<8x16xf32>
    tpu.vector_store %arg10[%c0_1, %c0_2], %0 {strides = array<i32>} : memref<8x24xf32, #tpu.memory_space<vmem>>, vector<8x16xf32>,
    %c0_3 = arith.constant 0 : index
    %c0_4 = arith.constant 0 : index
    %2 = vector.load %arg2[%c0_3, %c0_4] : memref<8x8xf32, #tpu.memory_space<vmem>>, vector<8x8xf32>
    %c0_5 = arith.constant 0 : index
    %c16 = arith.constant 16 : index
    %3 = vector.load %arg10[%c0_5, %c16] : memref<8x24xf32, #tpu.memory_space<vmem>>, vector<8x8xf32>
    tpu.vector_store %arg10[%c0_5, %c16], %2 {strides = array<i32>} : memref<8x24xf32, #tpu.memory_space<vmem>>, vector<8x8xf32>,
    %c0_6 = arith.constant 0 : index
    %c0_7 = arith.constant 0 : index
    %4 = vector.load %arg10[%c0_6, %c0_7] : memref<8x24xf32, #tpu.memory_space<vmem>>, vector<8x24xf32>
    %c0_8 = arith.constant 0 : index
    %c0_9 = arith.constant 0 : index
    %5 = vector.load %arg3[%c0_8, %c0_9] : memref<24x64xf32, #tpu.memory_space<vmem>>, vector<24x64xf32>
    %cst = arith.constant dense<0.000000e+00> : vector<8x64xf32>
    %6 = tpu.matmul %4, %5, %cst {dimension_numbers = #tpu.dot_dimension_numbers<[1], [0], [0], [1], [0, 0, 1, 1], [], []>} : vector<8x24xf32>, vector<24x64xf32>, vector<8x64xf32> -> vector<8x64xf32>
    %c0_10 = arith.constant 0 : index
    %c0_11 = arith.constant 0 : index
    %7 = vector.load %arg4[%c0_10, %c0_11] : memref<1x64xf32, #tpu.memory_space<vmem>>, vector<1x64xf32>
    %8 = vector.broadcast %7 : vector<1x64xf32> to vector<8x64xf32>
    %9 = arith.addf %6, %8 : vector<8x64xf32>
    %cst_12 = arith.constant 0.000000e+00 : f32
    %10 = vector.broadcast %cst_12 : f32 to vector<8x64xf32>
    %11 = arith.maximumf %9, %10 : vector<8x64xf32>
    %c0_13 = arith.constant 0 : index
    %c0_14 = arith.constant 0 : index
    %12 = vector.load %arg5[%c0_13, %c0_14] : memref<64x64xf32, #tpu.memory_space<vmem>>, vector<64x64xf32>
    %cst_15 = arith.constant dense<0.000000e+00> : vector<8x64xf32>
    %13 = tpu.matmul %11, %12, %cst_15 {dimension_numbers = #tpu.dot_dimension_numbers<[1], [0], [0], [1], [0, 0, 1, 1], [], []>} : vector<8x64xf32>, vector<64x64xf32>, vector<8x64xf32> -> vector<8x64xf32>
    %c0_16 = arith.constant 0 : index
    %c0_17 = arith.constant 0 : index
    %14 = vector.load %arg6[%c0_16, %c0_17] : memref<1x64xf32, #tpu.memory_space<vmem>>, vector<1x64xf32>
    %15 = vector.broadcast %14 : vector<1x64xf32> to vector<8x64xf32>
    %16 = arith.addf %13, %15 : vector<8x64xf32>
    %cst_18 = arith.constant 0.000000e+00 : f32
    %17 = vector.broadcast %cst_18 : f32 to vector<8x64xf32>
    %18 = arith.maximumf %16, %17 : vector<8x64xf32>
    %c0_19 = arith.constant 0 : index
    %c0_20 = arith.constant 0 : index
    %19 = vector.load %arg7[%c0_19, %c0_20] : memref<64x2xf32, #tpu.memory_space<vmem>>, vector<64x2xf32>
    %cst_21 = arith.constant dense<0.000000e+00> : vector<8x2xf32>
    %20 = tpu.matmul %18, %19, %cst_21 {dimension_numbers = #tpu.dot_dimension_numbers<[1], [0], [0], [1], [0, 0, 1, 1], [], []>} : vector<8x64xf32>, vector<64x2xf32>, vector<8x2xf32> -> vector<8x2xf32>
    %c0_22 = arith.constant 0 : index
    %c0_23 = arith.constant 0 : index
    %21 = vector.load %arg8[%c0_22, %c0_23] : memref<1x2xf32, #tpu.memory_space<vmem>>, vector<1x2xf32>
    %22 = vector.broadcast %21 : vector<1x2xf32> to vector<8x2xf32>
    %23 = arith.addf %20, %22 : vector<8x2xf32>
    %c0_24 = arith.constant 0 : index
    %c0_25 = arith.constant 0 : index
    %24 = vector.load %arg9[%c0_24, %c0_25] : memref<8x2xf32, #tpu.memory_space<vmem>>, vector<8x2xf32>
    tpu.vector_store %arg9[%c0_24, %c0_25], %23 {strides = array<i32>} : memref<8x2xf32, #tpu.memory_space<vmem>>, vector<8x2xf32>,
    return
  }
  func.func @transform_0(%arg0: i32) -> (i32, i32) {
    %c0_i32 = arith.constant 0 : i32
    %c0_i32_0 = arith.constant 0 : i32
    return %arg0, %c0_i32 : i32, i32
  }
  func.func @transform_1(%arg0: i32) -> (i32, i32) {
    %c0_i32 = arith.constant 0 : i32
    %c0_i32_0 = arith.constant 0 : i32
    return %arg0, %c0_i32 : i32, i32
  }
  func.func @transform_2(%arg0: i32) -> (i32, i32) {
    %c0_i32 = arith.constant 0 : i32
    %c0_i32_0 = arith.constant 0 : i32
    %c0_i32_1 = arith.constant 0 : i32
    return %c0_i32, %c0_i32_0 : i32, i32
  }
  func.func @transform_3(%arg0: i32) -> (i32, i32) {
    %c0_i32 = arith.constant 0 : i32
    %c0_i32_0 = arith.constant 0 : i32
    %c0_i32_1 = arith.constant 0 : i32
    return %c0_i32, %c0_i32_0 : i32, i32
  }
  func.func @transform_4(%arg0: i32) -> (i32, i32) {
    %c0_i32 = arith.constant 0 : i32
    %c0_i32_0 = arith.constant 0 : i32
    %c0_i32_1 = arith.constant 0 : i32
    return %c0_i32, %c0_i32_0 : i32, i32
  }
  func.func @transform_5(%arg0: i32) -> (i32, i32) {
    %c0_i32 = arith.constant 0 : i32
    %c0_i32_0 = arith.constant 0 : i32
    %c0_i32_1 = arith.constant 0 : i32
    return %c0_i32, %c0_i32_0 : i32, i32
  }
  func.func @transform_6(%arg0: i32) -> (i32, i32) {
    %c0_i32 = arith.constant 0 : i32
    %c0_i32_0 = arith.constant 0 : i32
    %c0_i32_1 = arith.constant 0 : i32
    return %c0_i32, %c0_i32_0 : i32, i32
  }
  func.func @transform_7(%arg0: i32) -> (i32, i32) {
    %c0_i32 = arith.constant 0 : i32
    %c0_i32_0 = arith.constant 0 : i32
    %c0_i32_1 = arith.constant 0 : i32
    return %c0_i32, %c0_i32_0 : i32, i32
  }
  func.func @transform_8(%arg0: i32) -> (i32, i32) {
    %c0_i32 = arith.constant 0 : i32
    %c0_i32_0 = arith.constant 0 : i32
    return %arg0, %c0_i32 : i32, i32
  }
}

</mosaic_0001>

<llo_original>
// kernel: tpu_custom_call.1
$region0: #{tpu_custom_call.1}
  #allocation0 [shape = 'u32[]', space=smem, size = 0x4, offset = 0x4, fixed_abs, tag = 'smem constant byte address 0x4 - core index']
  #allocation1 [shape = 'u32[144,128]{1,0:T(1,128)}', space=vmem, size = 0x12000, scoped, tag = 'internal scratch']
  #allocation2 [shape = 'f32[8,24]{1,0:T(8,128)}', space=vmem, size = 0x1000, scoped, tag = 'scratch operand']
  %s0 = inlined_call_operand.vmem [shape: f32[8,16], index: 0, kind: input, shape index: {}]
  %s1 = inlined_call_operand.hbm [shape: f32[8,8], index: 1, kind: input, shape index: {}]
  %s2 = inlined_call_operand.hbm [shape: f32[24,64], index: 2, kind: input, shape index: {}]
  %s3 = inlined_call_operand.vmem [shape: f32[1,64], index: 3, kind: input, shape index: {}]
  %s4 = inlined_call_operand.vmem [shape: f32[64,64], index: 4, kind: input, shape index: {}]
  %s5 = inlined_call_operand.hbm [shape: f32[1,64], index: 5, kind: input, shape index: {}]
  %s6 = inlined_call_operand.vmem [shape: f32[64,2], index: 6, kind: input, shape index: {}]
  %s7 = inlined_call_operand.vmem [shape: f32[1,2], index: 7, kind: input, shape index: {}]
  %s8 = inlined_call_operand.vmem [shape: f32[8,2], index: 8, kind: output, shape index: {}]
  %s9 = sld [smem:[#allocation0]]
  $region54: #{tpu_custom_call.1} parent=0
    _
  %s11 = ssub.s32 1, %s9
  %s12 = scalar_select 0, %s11, %s9
  $region1: #{tpu_custom_call.1} parent=0
    #allocation3 [shape = 'u8[4096]{0}', space=vmem, size = 0x1000, scoped, tag = 'input window, operand 1, single buffered']
    #allocation4 [shape = 's32[1]{0}', space=sflag, size = 0x4, scoped, tag = 'scoped memory for tpu_custom_call.1']
    #allocation5 [shape = 'u8[12288]{0}', space=vmem, size = 0x3000, scoped, tag = 'input window, operand 2, single buffered']
    #allocation6 [shape = 's32[1]{0}', space=sflag, size = 0x4, scoped, tag = 'scoped memory for tpu_custom_call.1']
    #allocation7 [shape = 'u8[512]{0}', space=vmem, size = 0x400, scoped, tag = 'input window, operand 5, single buffered']
    %13 = vsyncpa [#allocation4], 0
    %14 = vsyncpa [#allocation6], 0
    // Predicated region
    $region2: #{tpu_custom_call.1} parent=1 // pred_check
      _
    $region3: #{tpu_custom_call.1} parent=1 // pred_check_branch
      %16 = sbr.rel (0) target = $region5
    $region4: #{tpu_custom_call.1} parent=1 // pred_region
      _
    $region5: #{tpu_custom_call.1} parent=1 // pred_fallthru
      _
    // Predicated region
    $region6: #{tpu_custom_call.1} parent=1 // pred_check
      _
    $region7: #{tpu_custom_call.1} parent=1 // pred_check_branch
      %18 = sbr.rel (0) target = $region9
    $region8: #{tpu_custom_call.1} parent=1 // pred_region
      %s20 = ssub.s32 128, 128
      %21 = vsyncadd [#allocation4], %s20
      %s23 = sshll.u32 [#allocation3], 4
      %s24 = int_to_ptr.vmem [resolvable:$true] %s23
      %26 = dma.hbm_to_vmem [thread:$0]  %s1, 128, %s24, [#allocation4]
    $region9: #{tpu_custom_call.1} parent=1 // pred_fallthru
      _
    // Predicated region
    $region10: #{tpu_custom_call.1} parent=1 // pred_check
      _
    $region11: #{tpu_custom_call.1} parent=1 // pred_check_branch
      %28 = sbr.rel (0) target = $region13
    $region12: #{tpu_custom_call.1} parent=1 // pred_region
      %s30 = ssub.s32 384, 384
      %31 = vsyncadd [#allocation6], %s30
      %s32 = sshll.u32 [#allocation5], 4
      %s33 = int_to_ptr.vmem [resolvable:$true] %s32
      %38 = dma.hbm_to_vmem [thread:$0]  %s2, 384, %s33, [#allocation6], 128, 128, 8
    $region13: #{tpu_custom_call.1} parent=1 // pred_fallthru
      _
    // Predicated region
    $region14: #{tpu_custom_call.1} parent=1 // pred_check
      _
    $region15: #{tpu_custom_call.1} parent=1 // pred_check_branch
      %40 = sbr.rel (0) target = $region17
    $region16: #{tpu_custom_call.1} parent=1 // pred_region
      _
    $region17: #{tpu_custom_call.1} parent=1 // pred_fallthru
      _
    // Predicated region
    $region18: #{tpu_custom_call.1} parent=1 // pred_check
      _
    $region19: #{tpu_custom_call.1} parent=1 // pred_check_branch
      %42 = sbr.rel (0) target = $region21
    $region20: #{tpu_custom_call.1} parent=1 // pred_region
      _
    $region21: #{tpu_custom_call.1} parent=1 // pred_fallthru
      _
    // Predicated region
    $region22: #{tpu_custom_call.1} parent=1 // pred_check
      _
    $region23: #{tpu_custom_call.1} parent=1 // pred_check_branch
      %44 = sbr.rel (0) target = $region25
    $region24: #{tpu_custom_call.1} parent=1 // pred_region
      %s46 = ssub.s32 16, 16
      %47 = vsyncadd [#allocation6], %s46
      %s49 = sshll.u32 [#allocation7], 4
      %s50 = int_to_ptr.vmem [resolvable:$true] %s49
      %52 = dma.hbm_to_vmem [thread:$0]  %s5, 16, %s50, [#allocation6]
    $region25: #{tpu_custom_call.1} parent=1 // pred_fallthru
      _
    // Predicated region
    $region26: #{tpu_custom_call.1} parent=1 // pred_check
      _
    $region27: #{tpu_custom_call.1} parent=1 // pred_check_branch
      %54 = sbr.rel (0) target = $region29
    $region28: #{tpu_custom_call.1} parent=1 // pred_region
      _
    $region29: #{tpu_custom_call.1} parent=1 // pred_fallthru
      _
    // Predicated region
    $region30: #{tpu_custom_call.1} parent=1 // pred_check
      _
    $region31: #{tpu_custom_call.1} parent=1 // pred_check_branch
      %56 = sbr.rel (0) target = $region33
    $region32: #{tpu_custom_call.1} parent=1 // pred_region
      _
    $region33: #{tpu_custom_call.1} parent=1 // pred_fallthru
      _
    // Predicated region
    $region34: #{tpu_custom_call.1} parent=1 // pred_check
      _
    $region35: #{tpu_custom_call.1} parent=1 // pred_check_branch
      %58 = sbr.rel (0) target = $region37
    $region36: #{tpu_custom_call.1} parent=1 // pred_region
      %59 = dma.done [#allocation4], 128
    $region37: #{tpu_custom_call.1} parent=1 // pred_fallthru
      _
    // Predicated region
    $region38: #{tpu_custom_call.1} parent=1 // pred_check
      _
    $region39: #{tpu_custom_call.1} parent=1 // pred_check_branch
      %61 = sbr.rel (0) target = $region41
    $region40: #{tpu_custom_call.1} parent=1 // pred_region
      %62 = dma.done [#allocation6], 384
    $region41: #{tpu_custom_call.1} parent=1 // pred_fallthru
      _
    // Predicated region
    $region42: #{tpu_custom_call.1} parent=1 // pred_check
      _
    $region43: #{tpu_custom_call.1} parent=1 // pred_check_branch
      %64 = sbr.rel (0) target = $region45
    $region44: #{tpu_custom_call.1} parent=1 // pred_region
      %65 = dma.done [#allocation6], 16
    $region45: #{tpu_custom_call.1} parent=1 // pred_fallthru
      _
    %v66 = vld [vmem:[%s0] sm:$0xff]
    %vm67 = vcmask 130048
    %68 = vst.msk [vmem:[#allocation2] sm:$0xff] %vm67, %v66
    %v69 = vld [vmem:[#allocation3] sm:$0xff]
    %71 = vrot.lane.b32.xlu0 %v69, 16
    %v72 = vpop.permute.xlu0 %71
    %vm74 = vcmask 195712
    %75 = vst.msk [vmem:[#allocation2] sm:$0xff] %vm74, %v72
    %v76 = vld [vmem:[#allocation2] sm:$0xff]
    %v77 = vld [vmem:[#allocation5] sm:$0xff]
    %v78 = vld [vmem:[#allocation5 + $0x8] sm:$0xff]
    %v79 = vld [vmem:[#allocation5 + $0x10] sm:$0xff]
    %v80 = vld [vmem:[%s3] sm:$0x1]
    %v82 = vlaneseq
    %v83 = vshrl.u32 %v82, 7
    %v84 = vsub.s32 0, %v83
    %v85 = vrot.slane %v80, %v84
    %vm87 = vcmask 195584
    %v89 = vsel %vm87, %v76, 0
    %91 = vmatprep.subr.mxu0 0.0
    %92 = vmatpush1.msra.mxu0 0.0
    %93 = vmatprep.subr.mxu0 0.0
    %94 = vmatpush1.msra.mxu0 0.0
    %95 = vmatprep.subr.mxu0 0.0
    %96 = vmatpush1.msra.mxu0 0.0
    %97 = vmatprep.subr.mxu0 0.0
    %98 = vmatpush1.msra.mxu0 0.0
    %99 = vmatprep.subr.mxu0 0.0
    %100 = vmatpush1.msra.mxu0 0.0
    %101 = vmatprep.subr.mxu0 0.0
    %102 = vmatpush1.msra.mxu0 0.0
    %103 = vmatprep.subr.mxu0 0.0
    %104 = vmatpush1.msra.mxu0 0.0
    %105 = vmatprep.subr.mxu0 0.0
    %106 = vmatpush1.msra.mxu0 0.0
    %107 = vmatprep.subr.mxu0 0.0
    %108 = vmatpush1.msra.mxu0 0.0
    %109 = vmatprep.subr.mxu0 0.0
    %110 = vmatpush1.msra.mxu0 0.0
    %111 = vmatprep.subr.mxu0 0.0
    %112 = vmatpush1.msra.mxu0 0.0
    %113 = vmatprep.subr.mxu0 0.0
    %114 = vmatpush1.msra.mxu0 0.0
    %115 = vmatprep.subr.mxu0 0.0
    %116 = vmatpush1.msra.mxu0 0.0
    %117 = vmatprep.subr.mxu0 0.0
    %118 = vmatpush1.msra.mxu0 %v79
    %119 = vmatprep.subr.mxu0 0.0
    %120 = vmatpush1.msra.mxu0 %v78
    %121 = vmatprep.subr.mxu0 0.0
    %122 = vmatpush1.msra.mxu0 %v77
    %123 = vmatprep.subr.mxu0 0.0
    %124 = vmatpush2.msra.mxu0 0.0
    %125 = vmatprep.subr.mxu0 0.0
    %126 = vmatpush2.msra.mxu0 0.0
    %127 = vmatprep.subr.mxu0 0.0
    %128 = vmatpush2.msra.mxu0 0.0
    %129 = vmatprep.subr.mxu0 0.0
    %130 = vmatpush2.msra.mxu0 0.0
    %131 = vmatprep.subr.mxu0 0.0
    %132 = vmatpush2.msra.mxu0 0.0
    %133 = vmatprep.subr.mxu0 0.0
    %134 = vmatpush2.msra.mxu0 0.0
    %135 = vmatprep.subr.mxu0 0.0
    %136 = vmatpush2.msra.mxu0 0.0
    %137 = vmatprep.subr.mxu0 0.0
    %138 = vmatpush2.msra.mxu0 0.0
    %139 = vmatprep.subr.mxu0 0.0
    %140 = vmatpush2.msra.mxu0 0.0
    %141 = vmatprep.subr.mxu0 0.0
    %142 = vmatpush2.msra.mxu0 0.0
    %143 = vmatprep.subr.mxu0 0.0
    %144 = vmatpush2.msra.mxu0 0.0
    %145 = vmatprep.subr.mxu0 0.0
    %146 = vmatpush2.msra.mxu0 0.0
    %147 = vmatprep.subr.mxu0 0.0
    %148 = vmatpush2.msra.mxu0 0.0
    %149 = vmatprep.subr.mxu0 0.0
    %150 = vmatpush2.msra.mxu0 0.0
    %151 = vmatprep.subr.mxu0 0.0
    %152 = vmatpush2.msra.mxu0 0.0
    %153 = vmatprep.subr.mxu0 0.0
    %154 = vmatpush2.msra.mxu0 0.0
    %155 = vmatprep.mubr.f32.mxu0 0.0
    %156 = vmatmul.mubr.f32.gmra.mxu0 %v89
    %v157 = vpop.f32.mrf.mxu0
    %v158 = vadd.f32 %v85, %v157
    %v159 = vpop.f32.mrf.mxu0
    %160 = vdwg.mxu0
    %v161 = vmax.f32 %v158, 0.0
    %v162 = vld [vmem:[%s4] sm:$0xff]
    %v163 = vld [vmem:[%s4 + $0x8] sm:$0xff]
    %v164 = vld [vmem:[%s4 + $0x10] sm:$0xff]
    %v165 = vld [vmem:[%s4 + $0x18] sm:$0xff]
    %v166 = vld [vmem:[%s4 + $0x20] sm:$0xff]
    %v167 = vld [vmem:[%s4 + $0x28] sm:$0xff]
    %v168 = vld [vmem:[%s4 + $0x30] sm:$0xff]
    %v169 = vld [vmem:[%s4 + $0x38] sm:$0xff]
    %v170 = vld [vmem:[#allocation7] sm:$0x1]
    %v172 = vlaneseq
    %v173 = vshrl.u32 %v172, 7
    %v174 = vsub.s32 0, %v173
    %v175 = vrot.slane %v170, %v174
    %vm177 = vcmask 523264
    %v179 = vsel %vm177, %v161, 0
    %181 = vmatprep.subr.mxu0 0.0
    %182 = vmatpush1.msra.mxu0 0.0
    %183 = vmatprep.subr.mxu0 0.0
    %184 = vmatpush1.msra.mxu0 0.0
    %185 = vmatprep.subr.mxu0 0.0
    %186 = vmatpush1.msra.mxu0 0.0
    %187 = vmatprep.subr.mxu0 0.0
    %188 = vmatpush1.msra.mxu0 0.0
    %189 = vmatprep.subr.mxu0 0.0
    %190 = vmatpush1.msra.mxu0 0.0
    %191 = vmatprep.subr.mxu0 0.0
    %192 = vmatpush1.msra.mxu0 0.0
    %193 = vmatprep.subr.mxu0 0.0
    %194 = vmatpush1.msra.mxu0 0.0
    %195 = vmatprep.subr.mxu0 0.0
    %196 = vmatpush1.msra.mxu0 0.0
    %197 = vmatprep.subr.mxu0 0.0
    %198 = vmatpush1.msra.mxu0 %v169
    %199 = vmatprep.subr.mxu0 0.0
    %200 = vmatpush1.msra.mxu0 %v168
    %201 = vmatprep.subr.mxu0 0.0
    %202 = vmatpush1.msra.mxu0 %v167
    %203 = vmatprep.subr.mxu0 0.0
    %204 = vmatpush1.msra.mxu0 %v166
    %205 = vmatprep.subr.mxu0 0.0
    %206 = vmatpush1.msra.mxu0 %v165
    %207 = vmatprep.subr.mxu0 0.0
    %208 = vmatpush1.msra.mxu0 %v164
    %209 = vmatprep.subr.mxu0 0.0
    %210 = vmatpush1.msra.mxu0 %v163
    %211 = vmatprep.subr.mxu0 0.0
    %212 = vmatpush1.msra.mxu0 %v162
    %213 = vmatprep.subr.mxu0 0.0
    %214 = vmatpush2.msra.mxu0 0.0
    %215 = vmatprep.subr.mxu0 0.0
    %216 = vmatpush2.msra.mxu0 0.0
    %217 = vmatprep.subr.mxu0 0.0
    %218 = vmatpush2.msra.mxu0 0.0
    %219 = vmatprep.subr.mxu0 0.0
    %220 = vmatpush2.msra.mxu0 0.0
    %221 = vmatprep.subr.mxu0 0.0
    %222 = vmatpush2.msra.mxu0 0.0
    %223 = vmatprep.subr.mxu0 0.0
    %224 = vmatpush2.msra.mxu0 0.0
    %225 = vmatprep.subr.mxu0 0.0
    %226 = vmatpush2.msra.mxu0 0.0
    %227 = vmatprep.subr.mxu0 0.0
    %228 = vmatpush2.msra.mxu0 0.0
    %229 = vmatprep.subr.mxu0 0.0
    %230 = vmatpush2.msra.mxu0 0.0
    %231 = vmatprep.subr.mxu0 0.0
    %232 = vmatpush2.msra.mxu0 0.0
    %233 = vmatprep.subr.mxu0 0.0
    %234 = vmatpush2.msra.mxu0 0.0
    %235 = vmatprep.subr.mxu0 0.0
    %236 = vmatpush2.msra.mxu0 0.0
    %237 = vmatprep.subr.mxu0 0.0
    %238 = vmatpush2.msra.mxu0 0.0
    %239 = vmatprep.subr.mxu0 0.0
    %240 = vmatpush2.msra.mxu0 0.0
    %241 = vmatprep.subr.mxu0 0.0
    %242 = vmatpush2.msra.mxu0 0.0
    %243 = vmatprep.subr.mxu0 0.0
    %244 = vmatpush2.msra.mxu0 0.0
    %245 = vmatprep.mubr.f32.mxu0 0.0
    %246 = vmatmul.mubr.f32.gmra.mxu0 %v179
    %v247 = vpop.f32.mrf.mxu0
    %v248 = vadd.f32 %v175, %v247
    %v249 = vpop.f32.mrf.mxu0
    %250 = vdwg.mxu0
    %v251 = vmax.f32 %v248, 0.0
    %v252 = vld [vmem:[%s6] sm:$0xff]
    %v253 = vld [vmem:[%s6 + $0x8] sm:$0xff]
    %v254 = vld [vmem:[%s6 + $0x10] sm:$0xff]
    %v255 = vld [vmem:[%s6 + $0x18] sm:$0xff]
    %v256 = vld [vmem:[%s6 + $0x20] sm:$0xff]
    %v257 = vld [vmem:[%s6 + $0x28] sm:$0xff]
    %v258 = vld [vmem:[%s6 + $0x30] sm:$0xff]
    %v259 = vld [vmem:[%s6 + $0x38] sm:$0xff]
    %v260 = vld [vmem:[%s7] sm:$0x1]
    %v262 = vlaneseq
    %v263 = vshrl.u32 %v262, 7
    %v264 = vsub.s32 0, %v263
    %v265 = vrot.slane %v260, %v264
    %v268 = vsel %vm177, %v251, 0
    %270 = vmatprep.subr.mxu0 0.0
    %271 = vmatpush1.msra.mxu0 0.0
    %272 = vmatprep.subr.mxu0 0.0
    %273 = vmatpush1.msra.mxu0 0.0
    %274 = vmatprep.subr.mxu0 0.0
    %275 = vmatpush1.msra.mxu0 0.0
    %276 = vmatprep.subr.mxu0 0.0
    %277 = vmatpush1.msra.mxu0 0.0
    %278 = vmatprep.subr.mxu0 0.0
    %279 = vmatpush1.msra.mxu0 0.0
    %280 = vmatprep.subr.mxu0 0.0
    %281 = vmatpush1.msra.mxu0 0.0
    %282 = vmatprep.subr.mxu0 0.0
    %283 = vmatpush1.msra.mxu0 0.0
    %284 = vmatprep.subr.mxu0 0.0
    %285 = vmatpush1.msra.mxu0 0.0
    %286 = vmatprep.subr.mxu0 0.0
    %287 = vmatpush1.msra.mxu0 %v259
    %288 = vmatprep.subr.mxu0 0.0
    %289 = vmatpush1.msra.mxu0 %v258
    %290 = vmatprep.subr.mxu0 0.0
    %291 = vmatpush1.msra.mxu0 %v257
    %292 = vmatprep.subr.mxu0 0.0
    %293 = vmatpush1.msra.mxu0 %v256
    %294 = vmatprep.subr.mxu0 0.0
    %295 = vmatpush1.msra.mxu0 %v255
    %296 = vmatprep.subr.mxu0 0.0
    %297 = vmatpush1.msra.mxu0 %v254
    %298 = vmatprep.subr.mxu0 0.0
    %299 = vmatpush1.msra.mxu0 %v253
    %300 = vmatprep.subr.mxu0 0.0
    %301 = vmatpush1.msra.mxu0 %v252
    %302 = vmatprep.subr.mxu0 0.0
    %303 = vmatpush2.msra.mxu0 0.0
    %304 = vmatprep.subr.mxu0 0.0
    %305 = vmatpush2.msra.mxu0 0.0
    %306 = vmatprep.subr.mxu0 0.0
    %307 = vmatpush2.msra.mxu0 0.0
    %308 = vmatprep.subr.mxu0 0.0
    %309 = vmatpush2.msra.mxu0 0.0
    %310 = vmatprep.subr.mxu0 0.0
    %311 = vmatpush2.msra.mxu0 0.0
    %312 = vmatprep.subr.mxu0 0.0
    %313 = vmatpush2.msra.mxu0 0.0
    %314 = vmatprep.subr.mxu0 0.0
    %315 = vmatpush2.msra.mxu0 0.0
    %316 = vmatprep.subr.mxu0 0.0
    %317 = vmatpush2.msra.mxu0 0.0
    %318 = vmatprep.subr.mxu0 0.0
    %319 = vmatpush2.msra.mxu0 0.0
    %320 = vmatprep.subr.mxu0 0.0
    %321 = vmatpush2.msra.mxu0 0.0
    %322 = vmatprep.subr.mxu0 0.0
    %323 = vmatpush2.msra.mxu0 0.0
    %324 = vmatprep.subr.mxu0 0.0
    %325 = vmatpush2.msra.mxu0 0.0
    %326 = vmatprep.subr.mxu0 0.0
    %327 = vmatpush2.msra.mxu0 0.0
    %328 = vmatprep.subr.mxu0 0.0
    %329 = vmatpush2.msra.mxu0 0.0
    %330 = vmatprep.subr.mxu0 0.0
    %331 = vmatpush2.msra.mxu0 0.0
    %332 = vmatprep.subr.mxu0 0.0
    %333 = vmatpush2.msra.mxu0 0.0
    %334 = vmatprep.mubr.f32.mxu0 0.0
    %335 = vmatmul.mubr.f32.gmra.mxu0 %v268
    %v336 = vpop.f32.mrf.mxu0
    %v337 = vadd.f32 %v265, %v336
    %v338 = vpop.f32.mrf.mxu0
    %339 = vdwg.mxu0
    %vm340 = vcmask 15360
    %341 = vst.msk [vmem:[%s8] sm:$0xff] %vm340, %v337
    // Predicated region
    $region46: #{tpu_custom_call.1} parent=1 // pred_check
      _
    $region47: #{tpu_custom_call.1} parent=1 // pred_check_branch
      %343 = sbr.rel (0) target = $region49
    $region48: #{tpu_custom_call.1} parent=1 // pred_region
      _
    $region49: #{tpu_custom_call.1} parent=1 // pred_fallthru
      _
    // Predicated region
    $region50: #{tpu_custom_call.1} parent=1 // pred_check
      _
    $region51: #{tpu_custom_call.1} parent=1 // pred_check_branch
      %345 = sbr.rel (0) target = $region53
    $region52: #{tpu_custom_call.1} parent=1 // pred_region
      _
    $region53: #{tpu_custom_call.1} parent=1 // pred_fallthru
      _
    %346 = vsyncpa [#allocation4], 1
    %347 = vsyncpa [#allocation6], 1

</llo_original>
